<compile_context>
chip_gen: v7x
topology: tpu7x:2x2x1
jax: 0.10.0
libtpu: 0.0.40
codegen_flags: <defaults>
</compile_context>

<pallas_src>
import functools
import math

import jax
import jax.numpy as jnp
from jax.experimental import pallas as pl
from jax.experimental.pallas import tpu as pltpu

GAMMA = 2.0
EPS = 1e-7
LOG_EPS = math.log(EPS)
LOG_ONE_MINUS_EPS = math.log1p(-EPS)


def _focal_loss_kernel(x_ref, t_ref, out_ref, *, n_rows, block_n):
    i = pl.program_id(0)

    @pl.when(i == 0)
    def _init():
        out_ref[...] = jnp.zeros_like(out_ref)

    x = x_ref[...].astype(jnp.float32)          # [TN, C] (upcast after load)
    tn, c = x.shape

    # Row-wise log-sum-exp (no full-tile divide, no full-tile log).
    m = jnp.max(x, axis=1, keepdims=True)                        # [TN, 1]
    s = jnp.sum(jnp.exp(x - m), axis=1, keepdims=True)           # [TN, 1]

    # Gather the target-class logit with a one-hot lane mask.
    cls_ids = jax.lax.broadcasted_iota(jnp.int32, (tn, c), 1)
    onehot = cls_ids == t_ref[...]                               # [TN, C]
    x_t = jnp.sum(jnp.where(onehot, x, 0.0), axis=1, keepdims=True)  # [TN, 1]

    # log softmax at the target class; clamp in log space to match
    # torch's clamp(p, eps, 1 - eps) followed by log.
    log_pt = x_t - m - jnp.log(s)                                # [TN, 1]
    log_pt = jnp.clip(log_pt, LOG_EPS, LOG_ONE_MINUS_EPS)
    pt = jnp.exp(log_pt)

    q = 1.0 - pt
    loss = (-log_pt) * q * q                                     # gamma == 2

    # Mask out padded tail rows of the last block.
    row_ids = jax.lax.broadcasted_iota(jnp.int32, (tn, 1), 0)
    valid = (i * block_n + row_ids) < n_rows
    loss = jnp.where(valid, loss, 0.0)

    out_ref[...] = out_ref[...] + jnp.sum(loss, axis=0, keepdims=True)

    @pl.when(i == pl.num_programs(0) - 1)
    def _finalize():
        out_ref[...] = out_ref[...] * 0.01


def focal_loss_without_one_hot(logits, target, *, block_n=1024):
    """logits: [N, C] float (any dtype), target: [N] int -> scalar float32."""
    n, c = logits.shape
    # Batch tile must be a multiple of 8 (sublane granularity); cap at N
    # rounded up so tiny inputs still form a single legal block.
    block_n = max(8, min(block_n, ((n + 7) // 8) * 8))
    grid = (pl.cdiv(n, block_n),)
    t2d = target.astype(jnp.int32).reshape(n, 1)

    kernel = functools.partial(_focal_loss_kernel, n_rows=n, block_n=block_n)
    out = pl.pallas_call(
        kernel,
        out_shape=jax.ShapeDtypeStruct((1, 1), jnp.float32),
        grid=grid,
        in_specs=[
            pl.BlockSpec((block_n, c), lambda i: (i, 0)),
            pl.BlockSpec((block_n, 1), lambda i: (i, 0)),
        ],
        out_specs=pl.BlockSpec((1, 1), lambda i: (0, 0)),
        compiler_params=pltpu.CompilerParams(
            dimension_semantics=("arbitrary",)),
    )(logits, t2d)
    return out[0, 0]


def _reference(logits, target):
    p = jax.nn.softmax(logits.astype(jnp.float32), axis=1)
    p = jnp.clip(p, EPS, 1.0 - EPS)
    logp = jnp.log(p)
    rows = jnp.arange(logits.shape[0])
    pt = p[rows, target]
    log_pt = logp[rows, target]
    loss = (-log_pt) * (1.0 - pt) ** GAMMA
    return 0.01 * jnp.sum(loss)


if __name__ == "__main__":
    # Small shape matching the module's [N, C] logits + [N] int targets.
    kx, kt = jax.random.split(jax.random.PRNGKey(0))
    N, C = 8, 32
    logits = jax.random.normal(kx, (N, C), dtype=jnp.float32)
    target = jax.random.randint(kt, (N,), 0, C, dtype=jnp.int32)

    out = jax.block_until_ready(focal_loss_without_one_hot(logits, target))
    ref = _reference(logits, target)
    assert jnp.allclose(out, ref, atol=1e-5, rtol=1e-5), (out, ref)

    # Tiled path: N not a multiple of the block -> exercises grid
    # accumulation across steps and tail-row masking.
    kx2, kt2 = jax.random.split(jax.random.PRNGKey(1))
    N2, C2 = 200, 32
    logits2 = jax.random.normal(kx2, (N2, C2), dtype=jnp.float32)
    target2 = jax.random.randint(kt2, (N2,), 0, C2, dtype=jnp.int32)
    out2 = jax.block_until_ready(
        focal_loss_without_one_hot(logits2, target2, block_n=64))
    ref2 = _reference(logits2, target2)
    assert jnp.allclose(out2, ref2, atol=1e-4, rtol=1e-5), (out2, ref2)

    print("KERNEL_OK")
</pallas_src>

<mosaic_0001>
module attributes {stable_mosaic.version = 11 : i64} {
  func.func @_focal_loss_kernel(%arg0: i32, %arg1: memref<8x32xf32, #tpu.memory_space<vmem>>, %arg2: memref<8x1xi32, #tpu.memory_space<vmem>>, %arg3: memref<1x1xf32, #tpu.memory_space<vmem>>) attributes {dimension_semantics = [#tpu.dimension_semantics<arbitrary>], iteration_bounds = array<i64: 1>, scalar_prefetch = 0 : i64, scratch_operands = 0 : i64, tpu.core_type = #tpu.core_type<tc>, window_params = [{transform_indices = @transform_0, window_bounds = array<i64: 8, 32>}, {transform_indices = @transform_1, window_bounds = array<i64: 8, 1>}, {pipeline_mode = #tpu.pipeline_mode<synchronous>, transform_indices = @transform_2, window_bounds = array<i64: 1, 1>}]} {
    %c0_i32 = arith.constant 0 : i32
    %0 = arith.cmpi eq, %arg0, %c0_i32 : i32
    %1 = arith.extui %0 : i1 to i32
    %c0_i32_0 = arith.constant 0 : i32
    %2 = arith.cmpi ne, %1, %c0_i32_0 : i32
    scf.if %2 {
      %cst_20 = arith.constant 0.000000e+00 : f32
      %49 = vector.broadcast %cst_20 : f32 to vector<1x1xf32>
      %c0_21 = arith.constant 0 : index
      %c0_22 = arith.constant 0 : index
      %50 = vector.load %arg3[%c0_21, %c0_22] : memref<1x1xf32, #tpu.memory_space<vmem>>, vector<1x1xf32>
      tpu.vector_store %arg3[%c0_21, %c0_22], %49 {strides = array<i32>} : memref<1x1xf32, #tpu.memory_space<vmem>>, vector<1x1xf32>,
    } else {
    }
    %c0 = arith.constant 0 : index
    %c0_1 = arith.constant 0 : index
    %3 = vector.load %arg1[%c0, %c0_1] : memref<8x32xf32, #tpu.memory_space<vmem>>, vector<8x32xf32>
    %cst = arith.constant dense<0xFF800000> : vector<8xf32>
    %4 = vector.multi_reduction <maximumf>, %3, %cst [1] : vector<8x32xf32> to vector<8xf32>
    %5 = vector.shape_cast %4 : vector<8xf32> to vector<8x1xf32>
    %6 = vector.broadcast %5 : vector<8x1xf32> to vector<8x32xf32>
    %7 = arith.subf %3, %6 : vector<8x32xf32>
    %8 = math.exp %7 : vector<8x32xf32>
    %cst_2 = arith.constant dense<0.000000e+00> : vector<8xf32>
    %9 = vector.multi_reduction <add>, %8, %cst_2 [1] : vector<8x32xf32> to vector<8xf32>
    %10 = vector.shape_cast %9 : vector<8xf32> to vector<8x1xf32>
    %11 = tpu.iota {dimensions = array<i32: 1>} : vector<8x32xi32>
    %c0_3 = arith.constant 0 : index
    %c0_4 = arith.constant 0 : index
    %12 = vector.load %arg2[%c0_3, %c0_4] : memref<8x1xi32, #tpu.memory_space<vmem>>, vector<8x1xi32>
    %13 = vector.broadcast %12 : vector<8x1xi32> to vector<8x32xi32>
    %14 = arith.cmpi eq, %11, %13 : vector<8x32xi32>
    %cst_5 = arith.constant 0.000000e+00 : f32
    %15 = vector.broadcast %cst_5 : f32 to vector<8x32xf32>
    %16 = arith.select %14, %3, %15 : vector<8x32xi1>, vector<8x32xf32>
    %cst_6 = arith.constant dense<0.000000e+00> : vector<8xf32>
    %17 = vector.multi_reduction <add>, %16, %cst_6 [1] : vector<8x32xf32> to vector<8xf32>
    %18 = vector.shape_cast %17 : vector<8xf32> to vector<8x1xf32>
    %19 = arith.subf %18, %5 : vector<8x1xf32>
    %20 = math.log %10 : vector<8x1xf32>
    %21 = arith.subf %19, %20 : vector<8x1xf32>
    %cst_7 = arith.constant -16.1180954 : f32
    %cst_8 = arith.constant -1.00000008E-7 : f32
    %22 = vector.broadcast %cst_7 : f32 to vector<8x1xf32>
    %23 = arith.maximumf %22, %21 : vector<8x1xf32>
    %24 = vector.broadcast %cst_8 : f32 to vector<8x1xf32>
    %25 = arith.minimumf %24, %23 : vector<8x1xf32>
    %26 = math.exp %25 : vector<8x1xf32>
    %cst_9 = arith.constant 1.000000e+00 : f32
    %27 = vector.broadcast %cst_9 : f32 to vector<8x1xf32>
    %28 = arith.subf %27, %26 : vector<8x1xf32>
    %cst_10 = arith.constant 0.000000e+00 : f32
    %29 = vector.broadcast %cst_10 : f32 to vector<8x1xf32>
    %30 = arith.subf %29, %25 : vector<8x1xf32>
    %31 = arith.mulf %30, %28 : vector<8x1xf32>
    %32 = arith.mulf %31, %28 : vector<8x1xf32>
    %33 = tpu.iota {dimensions = array<i32: 0>} : vector<8x1xi32>
    %c8_i32 = arith.constant 8 : i32
    %34 = arith.muli %arg0, %c8_i32 : i32
    %35 = vector.broadcast %34 : i32 to vector<8x1xi32>
    %36 = arith.addi %35, %33 : vector<8x1xi32>
    %c8_i32_11 = arith.constant 8 : i32
    %37 = vector.broadcast %c8_i32_11 : i32 to vector<8x1xi32>
    %38 = arith.cmpi slt, %36, %37 : vector<8x1xi32>
    %cst_12 = arith.constant 0.000000e+00 : f32
    %39 = vector.broadcast %cst_12 : f32 to vector<8x1xf32>
    %40 = arith.select %38, %32, %39 : vector<8x1xi1>, vector<8x1xf32>
    %c0_13 = arith.constant 0 : index
    %c0_14 = arith.constant 0 : index
    %41 = vector.load %arg3[%c0_13, %c0_14] : memref<1x1xf32, #tpu.memory_space<vmem>>, vector<1x1xf32>
    %cst_15 = arith.constant dense<0.000000e+00> : vector<1xf32>
    %42 = vector.multi_reduction <add>, %40, %cst_15 [0] : vector<8x1xf32> to vector<1xf32>
    %43 = vector.shape_cast %42 : vector<1xf32> to vector<1x1xf32>
    %44 = arith.addf %41, %43 : vector<1x1xf32>
    %c0_16 = arith.constant 0 : index
    %c0_17 = arith.constant 0 : index
    %45 = vector.load %arg3[%c0_16, %c0_17] : memref<1x1xf32, #tpu.memory_space<vmem>>, vector<1x1xf32>
    tpu.vector_store %arg3[%c0_16, %c0_17], %44 {strides = array<i32>} : memref<1x1xf32, #tpu.memory_space<vmem>>, vector<1x1xf32>,
    %c0_i32_18 = arith.constant 0 : i32
    %46 = arith.cmpi eq, %arg0, %c0_i32_18 : i32
    %47 = arith.extui %46 : i1 to i32
    %c0_i32_19 = arith.constant 0 : i32
    %48 = arith.cmpi ne, %47, %c0_i32_19 : i32
    scf.if %48 {
      %c0_20 = arith.constant 0 : index
      %c0_21 = arith.constant 0 : index
      %49 = vector.load %arg3[%c0_20, %c0_21] : memref<1x1xf32, #tpu.memory_space<vmem>>, vector<1x1xf32>
      %cst_22 = arith.constant 0.00999999977 : f32
      %50 = vector.broadcast %cst_22 : f32 to vector<1x1xf32>
      %51 = arith.mulf %49, %50 : vector<1x1xf32>
      %c0_23 = arith.constant 0 : index
      %c0_24 = arith.constant 0 : index
      %52 = vector.load %arg3[%c0_23, %c0_24] : memref<1x1xf32, #tpu.memory_space<vmem>>, vector<1x1xf32>
      tpu.vector_store %arg3[%c0_23, %c0_24], %51 {strides = array<i32>} : memref<1x1xf32, #tpu.memory_space<vmem>>, vector<1x1xf32>,
    } else {
    }
    return
  }
  func.func @transform_0(%arg0: i32) -> (i32, i32) {
    %c0_i32 = arith.constant 0 : i32
    %c0_i32_0 = arith.constant 0 : i32
    return %arg0, %c0_i32 : i32, i32
  }
  func.func @transform_1(%arg0: i32) -> (i32, i32) {
    %c0_i32 = arith.constant 0 : i32
    %c0_i32_0 = arith.constant 0 : i32
    return %arg0, %c0_i32 : i32, i32
  }
  func.func @transform_2(%arg0: i32) -> (i32, i32) {
    %c0_i32 = arith.constant 0 : i32
    %c0_i32_0 = arith.constant 0 : i32
    %c0_i32_1 = arith.constant 0 : i32
    return %c0_i32, %c0_i32_0 : i32, i32
  }
}

</mosaic_0001>

<llo_original>
// kernel: tpu_custom_call.1
$region0: #{tpu_custom_call.1}
  #allocation0 [shape = 'u32[]', space=smem, size = 0x4, offset = 0x4, fixed_abs, tag = 'smem constant byte address 0x4 - core index']
  #allocation1 [shape = 'u32[144,128]{1,0:T(1,128)}', space=vmem, size = 0x12000, scoped, tag = 'internal scratch']
  %s0 = inlined_call_operand.vmem [shape: f32[8,32], index: 0, kind: input, shape index: {}]
  %s1 = inlined_call_operand.vmem [shape: s32[8,1], index: 1, kind: input, shape index: {}]
  %s2 = inlined_call_operand.hbm [shape: f32[1,1], index: 2, kind: output, shape index: {}]
  %s3 = sld [smem:[#allocation0]]
  $region26: #{tpu_custom_call.1} parent=0
    _
  %s5 = ssub.s32 1, %s3
  %s6 = scalar_select 0, %s5, %s3
  $region1: #{tpu_custom_call.1} parent=0
    #allocation2 [shape = 'u8[512]{0}', space=vmem, size = 0x400, scoped, tag = 'output window, operand 0, single buffered']
    #allocation3 [shape = 's32[1]{0}', space=sflag, size = 0x4, scoped, tag = 'scoped memory for tpu_custom_call.1']
    %7 = vsyncpa [#allocation3], 0
    // Predicated region
    $region2: #{tpu_custom_call.1} parent=1 // pred_check
      _
    $region3: #{tpu_custom_call.1} parent=1 // pred_check_branch
      %9 = sbr.rel (0) target = $region5
    $region4: #{tpu_custom_call.1} parent=1 // pred_region
      _
    $region5: #{tpu_custom_call.1} parent=1 // pred_fallthru
      _
    // Predicated region
    $region6: #{tpu_custom_call.1} parent=1 // pred_check
      _
    $region7: #{tpu_custom_call.1} parent=1 // pred_check_branch
      %11 = sbr.rel (0) target = $region9
    $region8: #{tpu_custom_call.1} parent=1 // pred_region
      _
    $region9: #{tpu_custom_call.1} parent=1 // pred_fallthru
      _
    %p12 = scmp.eq.s32.totalorder 0, 0
    // Predicated region
    $region10: #{tpu_custom_call.1} parent=1 // pred_check
      %p13 = pneg %p12
    $region11: #{tpu_custom_call.1} parent=1 // pred_check_branch
      %15 = sbr.rel (%p13) target = $region13
    $region12: #{tpu_custom_call.1} parent=1 // pred_region
      %vm16 = vcmask 0
      %17 = vst.msk [vmem:[#allocation2] sm:$0x1] %vm16, 0.0
    $region13: #{tpu_custom_call.1} parent=1 // pred_fallthru
      _
    %v18 = vld [vmem:[%s0] sm:$0xff]
    %vm19 = vcmask 261120
    %v20 = vsel %vm19, %v18, -inf
    %21 = vmax.xlane.f32.xlu0 %v20
    %v22 = vpop.xlane.xlu0 %21
    %v23 = vsub.f32 %v18, %v22
    %v24 = vmul.f32 %v23, 1.442695
    %v25 = vpow.pop %v24
    %v26 = vsel %vm19, %v25, 0.0
    %27 = vadd.xlane.f32.xlu0 %v26
    %v28 = vpop.xlane.xlu0 %27
    %v29 = vlaneseq
    %v30 = vand.u32 %v29, 127
    %v31 = vld [vmem:[%s1] sm:$0xff]
    %32 = vset.pattern.permute.xlu0 0
    %33 = vperm.xlu0 %32, %v31
    %v34 = vpop.permute.xlu0 %33
    %vm35 = vcmp.eq.s32.totalorder %v30, %v34
    %v36 = vsel %vm35, %v18, 0.0
    %v37 = vsel %vm19, %v36, 0.0
    %38 = vadd.xlane.f32.xlu0 %v37
    %v39 = vpop.xlane.xlu0 %38
    %v40 = vsub.f32 %v39, %v22
    %v41 = vlog2.pop %v28
    %v42 = vmul.f32 %v41, 0.6931472
    %v43 = vsub.f32 %v40, %v42
    %v44 = vmax.f32 %v43, -16.118095
    %v45 = vmin.f32 %v44, -1.0000001e-07
    %v46 = vmul.f32 %v45, 1.442695
    %v47 = vpow.pop %v46
    %v48 = vsub.f32 1.0, %v47
    %v49 = vsub.f32 0.0, %v45
    %v50 = vmul.f32 %v49, %v48
    %v51 = vmul.f32 %v50, %v48
    %v52 = vlaneseq
    %v53 = vshrl.u32 %v52, 7
    %s54 = smul.u32 0, 8
    %v55 = vstv %s54
    %v56 = vadd.s32 %v55, %v53
    %vm57 = vcmp.lt.s32.totalorder %v56, 8
    %v58 = vsel %vm57, %v51, 0.0
    %v59 = vld [vmem:[#allocation2] sm:$0x1]
    %v60 = vrot.slane %v58, 4
    %v61 = vadd.f32 %v58, %v60
    %v62 = vrot.slane %v61, 2
    %v63 = vadd.f32 %v61, %v62
    %v64 = vrot.slane %v63, 1
    %v65 = vadd.f32 %v63, %v64
    %v66 = vadd.f32 %v59, %v65
    %vm67 = vcmask 0
    %68 = vst.msk [vmem:[#allocation2] sm:$0x1] %vm67, %v66
    // Predicated region
    $region14: #{tpu_custom_call.1} parent=1 // pred_check
      %p69 = pneg %p12
    $region15: #{tpu_custom_call.1} parent=1 // pred_check_branch
      %71 = sbr.rel (%p69) target = $region17
    $region16: #{tpu_custom_call.1} parent=1 // pred_region
      %v72 = vld [vmem:[#allocation2] sm:$0x1]
      %v73 = vmul.f32 %v72, 0.01
      %74 = vst.msk [vmem:[#allocation2] sm:$0x1] %vm67, %v73
    $region17: #{tpu_custom_call.1} parent=1 // pred_fallthru
      _
    // Predicated region
    $region18: #{tpu_custom_call.1} parent=1 // pred_check
      _
    $region19: #{tpu_custom_call.1} parent=1 // pred_check_branch
      %76 = sbr.rel (0) target = $region21
    $region20: #{tpu_custom_call.1} parent=1 // pred_region
      %s78 = ssub.s32 16, 16
      %79 = vsyncadd [#allocation3], %s78
      %s81 = sshll.u32 [#allocation2], 4
      %s82 = int_to_ptr.vmem [resolvable:$true] %s81
      %84 = dma.vmem_to_hbm [thread:$0]  %s82, 16, %s2, [#allocation3]
    $region21: #{tpu_custom_call.1} parent=1 // pred_fallthru
      _
    // Predicated region
    $region22: #{tpu_custom_call.1} parent=1 // pred_check
      _
    $region23: #{tpu_custom_call.1} parent=1 // pred_check_branch
      %86 = sbr.rel (0) target = $region25
    $region24: #{tpu_custom_call.1} parent=1 // pred_region
      %87 = dma.done [#allocation3], 16
    $region25: #{tpu_custom_call.1} parent=1 // pred_fallthru
      _
    %88 = vsyncpa [#allocation3], 1

</llo_original>
